<compile_context>
chip_gen: v5e
topology: v5e:2x2
jax: 0.10.0
libtpu: 0.0.40
codegen_flags: <defaults>
</compile_context>

<pallas_src>
import jax
import jax.numpy as jnp
from jax.experimental import pallas as pl
from jax.experimental.pallas import tpu as pltpu


NUM_BOND_TYPE = 6
NUM_BOND_DIRECTION = 3
NUM_ATOM_TYPE = 120
NUM_CHIRALITY_TAG = 3


def _round_up(x, m):
    return ((x + m - 1) // m) * m


def _pad2(a, rows, cols):
    return jnp.pad(a, ((0, rows - a.shape[0]), (0, cols - a.shape[1])))


# ----------------------------- Pallas kernel --------------------------------
def _make_gin_kernel(num_layer):
    """Kernel factory: the layer count is a static Python constant."""

    def kernel(a_ref, h0_ref, b1_ref, w1_ref, w2_ref, b2_ref, out_ref):
        # a_ref : (Np, Np)    bf16   adjacency + I (self loops folded in)
        # h0_ref: (Np, Dp)    f32    initial node embeddings
        # b1_ref: (L, Np, Hp) f32    per-node bias  (S@ee + ee_self)@w1 + b1
        # w1_ref: (L, Dp, Hp) bf16
        # w2_ref: (L, Hp, Dp) bf16   (BN folded)
        # b2_ref: (L, 1,  Dp) f32    (BN folded)
        a = a_ref[...]
        h = h0_ref[...]
        for l in range(num_layer):                      # static, fully unrolled
            # aggregation: (A + I) @ h  — one MXU op, self loop included
            aggr = jnp.dot(a, h.astype(jnp.bfloat16),
                           preferred_element_type=jnp.float32)
            # GIN MLP: Linear(D,2D) -> ReLU -> Linear(2D,D); BN folded in w2/b2
            hmid = jnp.dot(aggr.astype(jnp.bfloat16), w1_ref[l],
                           preferred_element_type=jnp.float32) + b1_ref[l]
            hmid = jnp.maximum(hmid, 0.0)
            h = jnp.dot(hmid.astype(jnp.bfloat16), w2_ref[l],
                        preferred_element_type=jnp.float32) + b2_ref[l]
            if l < num_layer - 1:                       # ReLU on all but last
                h = jnp.maximum(h, 0.0)
        out_ref[...] = h                                # single store

    return kernel


def fused_gin_forward(A, h0, b1n, w1, w2, b2, *, num_layer):
    Np, Dp = h0.shape
    vmem_spec = pl.BlockSpec(memory_space=pltpu.MemorySpace.VMEM)
    return pl.pallas_call(
        _make_gin_kernel(num_layer),
        out_shape=jax.ShapeDtypeStruct((Np, Dp), jnp.float32),
        in_specs=[vmem_spec] * 6,
        out_specs=vmem_spec,
    )(A, h0, b1n, w1, w2, b2)


# ------------------------------ GNN wrapper ----------------------------------
def init_params(key, num_layer, emb_dim):
    D = emb_dim
    keys = jax.random.split(key, 2 + 10 * num_layer)
    it = iter(keys)
    p = {
        "x_emb1": jax.random.normal(next(it), (NUM_ATOM_TYPE, D), jnp.float32) * 0.1,
        "x_emb2": jax.random.normal(next(it), (NUM_CHIRALITY_TAG, D), jnp.float32) * 0.1,
        "layers": [],
    }
    for _ in range(num_layer):
        lp = {
            "edge_emb1": jax.random.normal(next(it), (NUM_BOND_TYPE, D), jnp.float32) * 0.1,
            "edge_emb2": jax.random.normal(next(it), (NUM_BOND_DIRECTION, D), jnp.float32) * 0.1,
            "w1": jax.random.normal(next(it), (D, 2 * D), jnp.float32) * 0.1,
            "b1": jax.random.normal(next(it), (1, 2 * D), jnp.float32) * 0.01,
            "w2": jax.random.normal(next(it), (2 * D, D), jnp.float32) * 0.1,
            "b2": jax.random.normal(next(it), (1, D), jnp.float32) * 0.01,
            "bn_gamma": 1.0 + 0.05 * jax.random.normal(next(it), (1, D), jnp.float32),
            "bn_beta": 0.05 * jax.random.normal(next(it), (1, D), jnp.float32),
            "bn_mean": 0.05 * jax.random.normal(next(it), (1, D), jnp.float32),
            "bn_var": 1.0 + 0.1 * jax.random.uniform(next(it), (1, D), jnp.float32),
        }
        p["layers"].append(lp)
    return p


def gnn_forward(params, x, edge_index, edge_attr, *, num_layer):
    """Eval-mode forward of GNN (JK='last', gnn_type='gin', aggr='add')."""
    N = x.shape[0]
    D = params["x_emb1"].shape[1]

    Np = _round_up(N, 8)          # sublane alignment for the node axis
    Dp = _round_up(D, 128)        # lane-dense embedding dim
    Hp = _round_up(2 * D, 128)    # lane-dense hidden dim of the GIN MLP

    # --- glue: initial node embedding lookup, zero-padded to (Np, Dp) ---
    h0 = jnp.take(params["x_emb1"], x[:, 0], axis=0) + \
         jnp.take(params["x_emb2"], x[:, 1], axis=0)              # (N, D)
    h0 = _pad2(h0, Np, Dp).astype(jnp.float32)

    # --- glue: dense aggregation operator with self loops folded in.
    #     A[i, j] = #edges j->i, plus identity on the REAL diagonal only.
    #     Small-integer counts are exact in bf16 (multiplicities <= 256 here).
    src, tgt = edge_index[0], edge_index[1]
    A = jnp.zeros((Np, Np), jnp.float32).at[tgt, src].add(1.0)
    A = A.at[jnp.arange(N), jnp.arange(N)].add(1.0)
    A = A.astype(jnp.bfloat16)

    # --- per-layer tensors: the edge-embedding aggregation is a layer constant
    #     (independent of h), so it is precomputed here and folded through the
    #     first Linear into a per-node bias B1_l.  BN folded into w2/b2.
    b1_l, w1_l, w2_l, b2_l = [], [], [], []
    for l in range(num_layer):
        lp = params["layers"][l]
        ee = jnp.take(lp["edge_emb1"], edge_attr[:, 0], axis=0) + \
             jnp.take(lp["edge_emb2"], edge_attr[:, 1], axis=0)            # (E, D)
        ee_self = lp["edge_emb1"][4] + lp["edge_emb2"][0]                  # (D,)
        # per-node edge-embedding sum: scatter-add over real edges + self loop
        C = jnp.zeros((N, D), jnp.float32).at[tgt].add(ee) + ee_self[None, :]
        B1 = C @ lp["w1"] + lp["b1"]                                       # (N, 2D)

        # fold eval-mode BatchNorm (eps=1e-5) into the second Linear
        scale = lp["bn_gamma"] * jax.lax.rsqrt(lp["bn_var"] + 1e-5)        # (1, D)
        w2f = lp["w2"] * scale                                             # (2D, D)
        b2f = (lp["b2"] - lp["bn_mean"]) * scale + lp["bn_beta"]           # (1, D)

        b1_l.append(_pad2(B1, Np, Hp).astype(jnp.float32))
        w1_l.append(_pad2(lp["w1"], Dp, Hp).astype(jnp.bfloat16))
        w2_l.append(_pad2(w2f, Hp, Dp).astype(jnp.bfloat16))
        b2_l.append(_pad2(b2f, 1, Dp).astype(jnp.float32))

    out = fused_gin_forward(
        A, h0,
        jnp.stack(b1_l), jnp.stack(w1_l), jnp.stack(w2_l), jnp.stack(b2_l),
        num_layer=num_layer,
    )
    return out[:N, :D]   # strip node / lane padding (JK == 'last')


def gnn_forward_ref(params, x, edge_index, edge_attr, *, num_layer):
    """Pure-JAX f32 reference (same math as the PyTorch module, no Pallas)."""
    N = x.shape[0]
    h = jnp.take(params["x_emb1"], x[:, 0], axis=0) + \
        jnp.take(params["x_emb2"], x[:, 1], axis=0)
    self_loops = jnp.arange(N, dtype=edge_index.dtype)
    src = jnp.concatenate([edge_index[0], self_loops])
    tgt = jnp.concatenate([edge_index[1], self_loops])
    self_loop_attr = jnp.stack(
        [jnp.full((N,), 4, edge_attr.dtype), jnp.zeros((N,), edge_attr.dtype)], axis=1)
    edge_attr_full = jnp.concatenate([edge_attr, self_loop_attr], axis=0)
    for l in range(num_layer):
        lp = params["layers"][l]
        ee = jnp.take(lp["edge_emb1"], edge_attr_full[:, 0], axis=0) + \
             jnp.take(lp["edge_emb2"], edge_attr_full[:, 1], axis=0)
        msgs = h[src] + ee
        aggr = jnp.zeros_like(h).at[tgt].add(msgs)
        hmid = jnp.maximum(aggr @ lp["w1"] + lp["b1"], 0.0)
        hout = hmid @ lp["w2"] + lp["b2"]
        y = (hout - lp["bn_mean"]) * jax.lax.rsqrt(lp["bn_var"] + 1e-5) * \
            lp["bn_gamma"] + lp["bn_beta"]
        if l != num_layer - 1:
            y = jnp.maximum(y, 0.0)
        h = y
    return h


# --------------------------------- main --------------------------------------
if __name__ == "__main__":
    num_layer = 3
    emb_dim = 32
    N = 16   # nodes
    E = 24   # directed edges

    key = jax.random.PRNGKey(0)
    k_params, k_x0, k_x1, k_src, k_tgt, k_e0, k_e1 = jax.random.split(key, 7)

    params = init_params(k_params, num_layer, emb_dim)

    # node features: (N, 2) int  -> [atom_type, chirality_tag]
    x = jnp.stack([
        jax.random.randint(k_x0, (N,), 0, NUM_ATOM_TYPE),
        jax.random.randint(k_x1, (N,), 0, NUM_CHIRALITY_TAG),
    ], axis=1).astype(jnp.int32)

    # edge_index: (2, E) int, edge_attr: (E, 2) int -> [bond_type, bond_direction]
    edge_index = jnp.stack([
        jax.random.randint(k_src, (E,), 0, N),
        jax.random.randint(k_tgt, (E,), 0, N),
    ], axis=0).astype(jnp.int32)
    edge_attr = jnp.stack([
        jax.random.randint(k_e0, (E,), 0, NUM_BOND_TYPE),
        jax.random.randint(k_e1, (E,), 0, NUM_BOND_DIRECTION),
    ], axis=1).astype(jnp.int32)

    out = gnn_forward(params, x, edge_index, edge_attr, num_layer=num_layer)
    out = jax.block_until_ready(out)

    ref = gnn_forward_ref(params, x, edge_index, edge_attr, num_layer=num_layer)
    ref = jax.block_until_ready(ref)

    assert out.shape == (N, emb_dim) and out.dtype == jnp.float32
    # Tolerance covers the bf16 MXU-operand casts (f32 accumulation); the
    # edge-embedding term is now computed in f32 on the host so per-layer
    # rounding is strictly smaller than the previous version.
    assert jnp.allclose(out, ref, atol=5e-2, rtol=5e-2), \
        "Pallas output mismatch vs JAX reference"

    # TODO(synk): training-mode dropout / batch-statistics BN not implemented (eval-mode forward).
    print("KERNEL_OK")
</pallas_src>

<mosaic_0001>
module attributes {stable_mosaic.version = 11 : i64} {
  func.func @kernel(%arg0: memref<16x16xbf16, #tpu.memory_space<vmem>>, %arg1: memref<16x128xf32, #tpu.memory_space<vmem>>, %arg2: memref<3x16x128xf32, #tpu.memory_space<vmem>>, %arg3: memref<3x128x128xbf16, #tpu.memory_space<vmem>>, %arg4: memref<3x128x128xbf16, #tpu.memory_space<vmem>>, %arg5: memref<3x1x128xf32, #tpu.memory_space<vmem>>, %arg6: memref<16x128xf32, #tpu.memory_space<vmem>>) attributes {dimension_semantics = [], scalar_prefetch = 0 : i64, scratch_operands = 0 : i64, tpu.core_type = #tpu.core_type<tc>} {
    %c0 = arith.constant 0 : index
    %c0_0 = arith.constant 0 : index
    %0 = vector.load %arg0[%c0, %c0_0] : memref<16x16xbf16, #tpu.memory_space<vmem>>, vector<16x16xbf16>
    %c0_1 = arith.constant 0 : index
    %c0_2 = arith.constant 0 : index
    %1 = vector.load %arg1[%c0_1, %c0_2] : memref<16x128xf32, #tpu.memory_space<vmem>>, vector<16x128xf32>
    %2 = arith.truncf %1 : vector<16x128xf32> to vector<16x128xbf16>
    %cst = arith.constant dense<0.000000e+00> : vector<16x128xf32>
    %3 = tpu.matmul %0, %2, %cst {dimension_numbers = #tpu.dot_dimension_numbers<[1], [0], [0], [1], [0, 0, 1, 1], [], []>} : vector<16x16xbf16>, vector<16x128xbf16>, vector<16x128xf32> -> vector<16x128xf32>
    %4 = arith.truncf %3 : vector<16x128xf32> to vector<16x128xbf16>
    %c0_3 = arith.constant 0 : index
    %c0_4 = arith.constant 0 : index
    %c0_5 = arith.constant 0 : index
    %5 = vector.load %arg3[%c0_3, %c0_4, %c0_5] : memref<3x128x128xbf16, #tpu.memory_space<vmem>>, vector<1x128x128xbf16>
    %6 = vector.shape_cast %5 : vector<1x128x128xbf16> to vector<128x128xbf16>
    %cst_6 = arith.constant dense<0.000000e+00> : vector<16x128xf32>
    %7 = tpu.matmul %4, %6, %cst_6 {dimension_numbers = #tpu.dot_dimension_numbers<[1], [0], [0], [1], [0, 0, 1, 1], [], []>} : vector<16x128xbf16>, vector<128x128xbf16>, vector<16x128xf32> -> vector<16x128xf32>
    %c0_7 = arith.constant 0 : index
    %c0_8 = arith.constant 0 : index
    %c0_9 = arith.constant 0 : index
    %8 = vector.load %arg2[%c0_7, %c0_8, %c0_9] : memref<3x16x128xf32, #tpu.memory_space<vmem>>, vector<1x16x128xf32>
    %9 = vector.shape_cast %8 : vector<1x16x128xf32> to vector<16x128xf32>
    %10 = arith.addf %7, %9 : vector<16x128xf32>
    %cst_10 = arith.constant 0.000000e+00 : f32
    %11 = vector.broadcast %cst_10 : f32 to vector<16x128xf32>
    %12 = arith.maximumf %10, %11 : vector<16x128xf32>
    %13 = arith.truncf %12 : vector<16x128xf32> to vector<16x128xbf16>
    %c0_11 = arith.constant 0 : index
    %c0_12 = arith.constant 0 : index
    %c0_13 = arith.constant 0 : index
    %14 = vector.load %arg4[%c0_11, %c0_12, %c0_13] : memref<3x128x128xbf16, #tpu.memory_space<vmem>>, vector<1x128x128xbf16>
    %15 = vector.shape_cast %14 : vector<1x128x128xbf16> to vector<128x128xbf16>
    %cst_14 = arith.constant dense<0.000000e+00> : vector<16x128xf32>
    %16 = tpu.matmul %13, %15, %cst_14 {dimension_numbers = #tpu.dot_dimension_numbers<[1], [0], [0], [1], [0, 0, 1, 1], [], []>} : vector<16x128xbf16>, vector<128x128xbf16>, vector<16x128xf32> -> vector<16x128xf32>
    %c0_15 = arith.constant 0 : index
    %c0_16 = arith.constant 0 : index
    %c0_17 = arith.constant 0 : index
    %17 = vector.load %arg5[%c0_15, %c0_16, %c0_17] : memref<3x1x128xf32, #tpu.memory_space<vmem>>, vector<1x1x128xf32>
    %18 = vector.shape_cast %17 : vector<1x1x128xf32> to vector<1x128xf32>
    %19 = vector.broadcast %18 : vector<1x128xf32> to vector<16x128xf32>
    %20 = arith.addf %16, %19 : vector<16x128xf32>
    %cst_18 = arith.constant 0.000000e+00 : f32
    %21 = vector.broadcast %cst_18 : f32 to vector<16x128xf32>
    %22 = arith.maximumf %20, %21 : vector<16x128xf32>
    %23 = arith.truncf %22 : vector<16x128xf32> to vector<16x128xbf16>
    %cst_19 = arith.constant dense<0.000000e+00> : vector<16x128xf32>
    %24 = tpu.matmul %0, %23, %cst_19 {dimension_numbers = #tpu.dot_dimension_numbers<[1], [0], [0], [1], [0, 0, 1, 1], [], []>} : vector<16x16xbf16>, vector<16x128xbf16>, vector<16x128xf32> -> vector<16x128xf32>
    %25 = arith.truncf %24 : vector<16x128xf32> to vector<16x128xbf16>
    %c1 = arith.constant 1 : index
    %c0_20 = arith.constant 0 : index
    %c0_21 = arith.constant 0 : index
    %26 = vector.load %arg3[%c1, %c0_20, %c0_21] : memref<3x128x128xbf16, #tpu.memory_space<vmem>>, vector<1x128x128xbf16>
    %27 = vector.shape_cast %26 : vector<1x128x128xbf16> to vector<128x128xbf16>
    %cst_22 = arith.constant dense<0.000000e+00> : vector<16x128xf32>
    %28 = tpu.matmul %25, %27, %cst_22 {dimension_numbers = #tpu.dot_dimension_numbers<[1], [0], [0], [1], [0, 0, 1, 1], [], []>} : vector<16x128xbf16>, vector<128x128xbf16>, vector<16x128xf32> -> vector<16x128xf32>
    %c1_23 = arith.constant 1 : index
    %c0_24 = arith.constant 0 : index
    %c0_25 = arith.constant 0 : index
    %29 = vector.load %arg2[%c1_23, %c0_24, %c0_25] : memref<3x16x128xf32, #tpu.memory_space<vmem>>, vector<1x16x128xf32>
    %30 = vector.shape_cast %29 : vector<1x16x128xf32> to vector<16x128xf32>
    %31 = arith.addf %28, %30 : vector<16x128xf32>
    %cst_26 = arith.constant 0.000000e+00 : f32
    %32 = vector.broadcast %cst_26 : f32 to vector<16x128xf32>
    %33 = arith.maximumf %31, %32 : vector<16x128xf32>
    %34 = arith.truncf %33 : vector<16x128xf32> to vector<16x128xbf16>
    %c1_27 = arith.constant 1 : index
    %c0_28 = arith.constant 0 : index
    %c0_29 = arith.constant 0 : index
    %35 = vector.load %arg4[%c1_27, %c0_28, %c0_29] : memref<3x128x128xbf16, #tpu.memory_space<vmem>>, vector<1x128x128xbf16>
    %36 = vector.shape_cast %35 : vector<1x128x128xbf16> to vector<128x128xbf16>
    %cst_30 = arith.constant dense<0.000000e+00> : vector<16x128xf32>
    %37 = tpu.matmul %34, %36, %cst_30 {dimension_numbers = #tpu.dot_dimension_numbers<[1], [0], [0], [1], [0, 0, 1, 1], [], []>} : vector<16x128xbf16>, vector<128x128xbf16>, vector<16x128xf32> -> vector<16x128xf32>
    %c1_31 = arith.constant 1 : index
    %c0_32 = arith.constant 0 : index
    %c0_33 = arith.constant 0 : index
    %38 = vector.load %arg5[%c1_31, %c0_32, %c0_33] : memref<3x1x128xf32, #tpu.memory_space<vmem>>, vector<1x1x128xf32>
    %39 = vector.shape_cast %38 : vector<1x1x128xf32> to vector<1x128xf32>
    %40 = vector.broadcast %39 : vector<1x128xf32> to vector<16x128xf32>
    %41 = arith.addf %37, %40 : vector<16x128xf32>
    %cst_34 = arith.constant 0.000000e+00 : f32
    %42 = vector.broadcast %cst_34 : f32 to vector<16x128xf32>
    %43 = arith.maximumf %41, %42 : vector<16x128xf32>
    %44 = arith.truncf %43 : vector<16x128xf32> to vector<16x128xbf16>
    %cst_35 = arith.constant dense<0.000000e+00> : vector<16x128xf32>
    %45 = tpu.matmul %0, %44, %cst_35 {dimension_numbers = #tpu.dot_dimension_numbers<[1], [0], [0], [1], [0, 0, 1, 1], [], []>} : vector<16x16xbf16>, vector<16x128xbf16>, vector<16x128xf32> -> vector<16x128xf32>
    %46 = arith.truncf %45 : vector<16x128xf32> to vector<16x128xbf16>
    %c2 = arith.constant 2 : index
    %c0_36 = arith.constant 0 : index
    %c0_37 = arith.constant 0 : index
    %47 = vector.load %arg3[%c2, %c0_36, %c0_37] : memref<3x128x128xbf16, #tpu.memory_space<vmem>>, vector<1x128x128xbf16>
    %48 = vector.shape_cast %47 : vector<1x128x128xbf16> to vector<128x128xbf16>
    %cst_38 = arith.constant dense<0.000000e+00> : vector<16x128xf32>
    %49 = tpu.matmul %46, %48, %cst_38 {dimension_numbers = #tpu.dot_dimension_numbers<[1], [0], [0], [1], [0, 0, 1, 1], [], []>} : vector<16x128xbf16>, vector<128x128xbf16>, vector<16x128xf32> -> vector<16x128xf32>
    %c2_39 = arith.constant 2 : index
    %c0_40 = arith.constant 0 : index
    %c0_41 = arith.constant 0 : index
    %50 = vector.load %arg2[%c2_39, %c0_40, %c0_41] : memref<3x16x128xf32, #tpu.memory_space<vmem>>, vector<1x16x128xf32>
    %51 = vector.shape_cast %50 : vector<1x16x128xf32> to vector<16x128xf32>
    %52 = arith.addf %49, %51 : vector<16x128xf32>
    %cst_42 = arith.constant 0.000000e+00 : f32
    %53 = vector.broadcast %cst_42 : f32 to vector<16x128xf32>
    %54 = arith.maximumf %52, %53 : vector<16x128xf32>
    %55 = arith.truncf %54 : vector<16x128xf32> to vector<16x128xbf16>
    %c2_43 = arith.constant 2 : index
    %c0_44 = arith.constant 0 : index
    %c0_45 = arith.constant 0 : index
    %56 = vector.load %arg4[%c2_43, %c0_44, %c0_45] : memref<3x128x128xbf16, #tpu.memory_space<vmem>>, vector<1x128x128xbf16>
    %57 = vector.shape_cast %56 : vector<1x128x128xbf16> to vector<128x128xbf16>
    %cst_46 = arith.constant dense<0.000000e+00> : vector<16x128xf32>
    %58 = tpu.matmul %55, %57, %cst_46 {dimension_numbers = #tpu.dot_dimension_numbers<[1], [0], [0], [1], [0, 0, 1, 1], [], []>} : vector<16x128xbf16>, vector<128x128xbf16>, vector<16x128xf32> -> vector<16x128xf32>
    %c2_47 = arith.constant 2 : index
    %c0_48 = arith.constant 0 : index
    %c0_49 = arith.constant 0 : index
    %59 = vector.load %arg5[%c2_47, %c0_48, %c0_49] : memref<3x1x128xf32, #tpu.memory_space<vmem>>, vector<1x1x128xf32>
    %60 = vector.shape_cast %59 : vector<1x1x128xf32> to vector<1x128xf32>
    %61 = vector.broadcast %60 : vector<1x128xf32> to vector<16x128xf32>
    %62 = arith.addf %58, %61 : vector<16x128xf32>
    %c0_50 = arith.constant 0 : index
    %c0_51 = arith.constant 0 : index
    %63 = vector.load %arg6[%c0_50, %c0_51] : memref<16x128xf32, #tpu.memory_space<vmem>>, vector<16x128xf32>
    tpu.vector_store %arg6[%c0_50, %c0_51], %62 {strides = array<i32>} : memref<16x128xf32, #tpu.memory_space<vmem>>, vector<16x128xf32>,
    return
  }
}

</mosaic_0001>

<llo_original>
// kernel: tpu_custom_call.1
$region0: #{tpu_custom_call.1}
  #allocation0 [shape = 'u32[]', space=smem, size = 0x4, offset = 0x4, fixed_abs, tag = 'smem constant byte address 0x4 - core index']
  #allocation1 [shape = 'u32[72,128]{1,0:T(1,128)}', space=vmem, size = 0x9000, scoped, tag = 'internal scratch']
  %s0 = inlined_call_operand.hbm [shape: bf16[16,16], index: 0, kind: input, shape index: {}]
  %s1 = inlined_call_operand.hbm [shape: f32[16,128], index: 1, kind: input, shape index: {}]
  %s2 = inlined_call_operand.hbm [shape: f32[3,16,128], index: 2, kind: input, shape index: {}]
  %s3 = inlined_call_operand.hbm [shape: bf16[3,128,128], index: 3, kind: input, shape index: {}]
  %s4 = inlined_call_operand.hbm [shape: bf16[3,128,128], index: 4, kind: input, shape index: {}]
  %s5 = inlined_call_operand.vmem [shape: f32[3,1,128], index: 5, kind: input, shape index: {}]
  %s6 = inlined_call_operand.hbm [shape: f32[16,128], index: 6, kind: output, shape index: {}]
  %s7 = sld [smem:[#allocation0]]
  $region54: #{tpu_custom_call.1} parent=0
    _
  %s9 = ssub.s32 1, %s7
  %s10 = scalar_select 0, %s9, %s7
  $region1: #{tpu_custom_call.1} parent=0
    #allocation2 [shape = 'u8[4096]{0}', space=vmem, size = 0x1000, scoped, tag = 'input window, operand 0, single buffered']
    #allocation3 [shape = 's32[1]{0}', space=sflag, size = 0x4, scoped, tag = 'scoped memory for tpu_custom_call.1']
    #allocation4 [shape = 's32[1]{0}', space=sflag, size = 0x4, scoped, tag = 'scoped memory for tpu_custom_call.1']
    #allocation5 [shape = 'u8[8192]{0}', space=vmem, size = 0x2000, scoped, tag = 'input window, operand 1, single buffered']
    #allocation6 [shape = 's32[1]{0}', space=sflag, size = 0x4, scoped, tag = 'scoped memory for tpu_custom_call.1']
    #allocation7 [shape = 'u8[24576]{0}', space=vmem, size = 0x6000, scoped, tag = 'input window, operand 2, single buffered']
    #allocation8 [shape = 'u8[98304]{0}', space=vmem, size = 0x18000, scoped, tag = 'input window, operand 3, single buffered']
    #allocation9 [shape = 's32[1]{0}', space=sflag, size = 0x4, scoped, tag = 'scoped memory for tpu_custom_call.1']
    #allocation10 [shape = 'u8[98304]{0}', space=vmem, size = 0x18000, scoped, tag = 'input window, operand 4, single buffered']
    #allocation11 [shape = 'u8[8192]{0}', space=vmem, size = 0x2000, scoped, tag = 'output window, operand 0, single buffered']
    %11 = vsyncpa [#allocation3], 0
    %12 = vsyncpa [#allocation6], 0
    %13 = vsyncpa [#allocation9], 0
    %14 = vsyncpa [#allocation4], 0
    // Predicated region
    $region2: #{tpu_custom_call.1} parent=1 // pred_check
      _
    $region3: #{tpu_custom_call.1} parent=1 // pred_check_branch
      %16 = sbr.rel (0) target = $region5
    $region4: #{tpu_custom_call.1} parent=1 // pred_region
      %18 = vsyncadd [#allocation3], 0
      %s19 = sshll.u32 %s0, 4
      %s20 = int_to_ptr.hbm [resolvable:$true] %s19
      %s21 = sshll.u32 [#allocation2], 4
      %s22 = int_to_ptr.vmem [resolvable:$true] %s21
      %27 = dma.hbm_to_vmem [thread:$0]  %s20, 128, %s22, [#allocation3], 64, 64, 4
    $region5: #{tpu_custom_call.1} parent=1 // pred_fallthru
      _
    // Predicated region
    $region6: #{tpu_custom_call.1} parent=1 // pred_check
      _
    $region7: #{tpu_custom_call.1} parent=1 // pred_check_branch
      %29 = sbr.rel (0) target = $region9
    $region8: #{tpu_custom_call.1} parent=1 // pred_region
      %31 = vsyncadd [#allocation6], 0
      %s32 = sshll.u32 %s1, 4
      %s33 = int_to_ptr.hbm [resolvable:$true] %s32
      %s34 = sshll.u32 [#allocation5], 4
      %s35 = int_to_ptr.vmem [resolvable:$true] %s34
      %40 = dma.hbm_to_vmem [thread:$0]  %s33, 256, %s35, [#allocation6], 128, 128, 8
    $region9: #{tpu_custom_call.1} parent=1 // pred_fallthru
      _
    // Predicated region
    $region10: #{tpu_custom_call.1} parent=1 // pred_check
      _
    $region11: #{tpu_custom_call.1} parent=1 // pred_check_branch
      %42 = sbr.rel (0) target = $region13
    $region12: #{tpu_custom_call.1} parent=1 // pred_region
      %44 = vsyncadd [#allocation6], 0
      %s45 = sshll.u32 %s2, 4
      %s46 = int_to_ptr.hbm [resolvable:$true] %s45
      %s47 = sshll.u32 [#allocation7], 4
      %s48 = int_to_ptr.vmem [resolvable:$true] %s47
      %53 = dma.hbm_to_vmem [thread:$0]  %s46, 768, %s48, [#allocation6], 128, 128, 8
    $region13: #{tpu_custom_call.1} parent=1 // pred_fallthru
      _
    // Predicated region
    $region14: #{tpu_custom_call.1} parent=1 // pred_check
      _
    $region15: #{tpu_custom_call.1} parent=1 // pred_check_branch
      %55 = sbr.rel (0) target = $region17
    $region16: #{tpu_custom_call.1} parent=1 // pred_region
      %57 = vsyncadd [#allocation9], 0
      %s58 = sshll.u32 %s3, 4
      %s59 = int_to_ptr.hbm [resolvable:$true] %s58
      %s60 = sshll.u32 [#allocation8], 4
      %s61 = int_to_ptr.vmem [resolvable:$true] %s60
      %66 = dma.hbm_to_vmem [thread:$0]  %s59, 3072, %s61, [#allocation9], 64, 64, 4
    $region17: #{tpu_custom_call.1} parent=1 // pred_fallthru
      _
    // Predicated region
    $region18: #{tpu_custom_call.1} parent=1 // pred_check
      _
    $region19: #{tpu_custom_call.1} parent=1 // pred_check_branch
      %68 = sbr.rel (0) target = $region21
    $region20: #{tpu_custom_call.1} parent=1 // pred_region
      %70 = vsyncadd [#allocation9], 0
      %s71 = sshll.u32 %s4, 4
      %s72 = int_to_ptr.hbm [resolvable:$true] %s71
      %s73 = sshll.u32 [#allocation10], 4
      %s74 = int_to_ptr.vmem [resolvable:$true] %s73
      %79 = dma.hbm_to_vmem [thread:$0]  %s72, 3072, %s74, [#allocation9], 64, 64, 4
    $region21: #{tpu_custom_call.1} parent=1 // pred_fallthru
      _
    // Predicated region
    $region22: #{tpu_custom_call.1} parent=1 // pred_check
      _
    $region23: #{tpu_custom_call.1} parent=1 // pred_check_branch
      %81 = sbr.rel (0) target = $region25
    $region24: #{tpu_custom_call.1} parent=1 // pred_region
      _
    $region25: #{tpu_custom_call.1} parent=1 // pred_fallthru
      _
    // Predicated region
    $region26: #{tpu_custom_call.1} parent=1 // pred_check
      _
    $region27: #{tpu_custom_call.1} parent=1 // pred_check_branch
      %83 = sbr.rel (0) target = $region29
    $region28: #{tpu_custom_call.1} parent=1 // pred_region
      %85 = dma.done [#allocation3], 128
    $region29: #{tpu_custom_call.1} parent=1 // pred_fallthru
      _
    // Predicated region
    $region30: #{tpu_custom_call.1} parent=1 // pred_check
      _
    $region31: #{tpu_custom_call.1} parent=1 // pred_check_branch
      %87 = sbr.rel (0) target = $region33
    $region32: #{tpu_custom_call.1} parent=1 // pred_region
      %89 = dma.done [#allocation6], 256
    $region33: #{tpu_custom_call.1} parent=1 // pred_fallthru
      _
    // Predicated region
    $region34: #{tpu_custom_call.1} parent=1 // pred_check
      _
    $region35: #{tpu_custom_call.1} parent=1 // pred_check_branch
      %91 = sbr.rel (0) target = $region37
    $region36: #{tpu_custom_call.1} parent=1 // pred_region
      %93 = dma.done [#allocation6], 768
    $region37: #{tpu_custom_call.1} parent=1 // pred_fallthru
      _
    // Predicated region
    $region38: #{tpu_custom_call.1} parent=1 // pred_check
      _
    $region39: #{tpu_custom_call.1} parent=1 // pred_check_branch
      %95 = sbr.rel (0) target = $region41
    $region40: #{tpu_custom_call.1} parent=1 // pred_region
      %97 = dma.done [#allocation9], 3072
    $region41: #{tpu_custom_call.1} parent=1 // pred_fallthru
      _
    // Predicated region
    $region42: #{tpu_custom_call.1} parent=1 // pred_check
      _
    $region43: #{tpu_custom_call.1} parent=1 // pred_check_branch
      %99 = sbr.rel (0) target = $region45
    $region44: #{tpu_custom_call.1} parent=1 // pred_region
      %101 = dma.done [#allocation9], 3072
    $region45: #{tpu_custom_call.1} parent=1 // pred_fallthru
      _
    %v103 = vld [vmem:[#allocation2] sm:$0xf]
    %v104 = vld [vmem:[#allocation2 + $0x4] sm:$0xf]
    %v105 = vld [vmem:[#allocation5] sm:$0xff]
    %v106 = vld [vmem:[#allocation5 + $0x8] sm:$0xff]
    %v107 = vpack.c.bf16 %v106, %v105
    %v110 = vunpack.c.l.b16 %v103
    %v111 = vunpack.c.l.b16 %v104
    %v112 = vpack.c.b16 %v111, %v110
    %vm113 = vcmask 130048
    %v115 = vsel %vm113, %v112, 0
    %117 = vmatpush.bf16.msra.mxu0 0
    %118 = vmatpush.bf16.msra.mxu0 0
    %119 = vmatpush.bf16.msra.mxu0 0
    %120 = vmatpush.bf16.msra.mxu0 0
    %121 = vmatpush.bf16.msra.mxu0 0
    %122 = vmatpush.bf16.msra.mxu0 0
    %123 = vmatpush.bf16.msra.mxu0 0
    %124 = vmatpush.bf16.msra.mxu0 %v107
    %125 = vmatmul.bf16.gmra.mxu0 %v115
    %v126 = vpop.f32.mrf.mxu0
    %v127 = vadd.f32 0.0, %v126
    %v128 = vpop.f32.mrf.mxu0
    %v129 = vadd.f32 0.0, %v128
    %130 = vdwg.mxu0
    %v131 = vpack.c.bf16 %v129, %v127
    %v132 = vld [vmem:[#allocation8] sm:$0xf]
    %v133 = vld [vmem:[#allocation8 + $0x4] sm:$0xf]
    %v134 = vld [vmem:[#allocation8 + $0x8] sm:$0xf]
    %v135 = vld [vmem:[#allocation8 + $0xc] sm:$0xf]
    %v136 = vld [vmem:[#allocation8 + $0x10] sm:$0xf]
    %v137 = vld [vmem:[#allocation8 + $0x14] sm:$0xf]
    %v138 = vld [vmem:[#allocation8 + $0x18] sm:$0xf]
    %v139 = vld [vmem:[#allocation8 + $0x1c] sm:$0xf]
    %v140 = vld [vmem:[#allocation8 + $0x20] sm:$0xf]
    %v141 = vld [vmem:[#allocation8 + $0x24] sm:$0xf]
    %v142 = vld [vmem:[#allocation8 + $0x28] sm:$0xf]
    %v143 = vld [vmem:[#allocation8 + $0x2c] sm:$0xf]
    %v144 = vld [vmem:[#allocation8 + $0x30] sm:$0xf]
    %v145 = vld [vmem:[#allocation8 + $0x34] sm:$0xf]
    %v146 = vld [vmem:[#allocation8 + $0x38] sm:$0xf]
    %v147 = vld [vmem:[#allocation8 + $0x3c] sm:$0xf]
    %v148 = vld [vmem:[#allocation7] sm:$0xff]
    %v149 = vld [vmem:[#allocation7 + $0x8] sm:$0xff]
    %v166 = vunpack.c.l.b16 %v132
    %v167 = vunpack.c.l.b16 %v133
    %v168 = vunpack.c.l.b16 %v134
    %v169 = vunpack.c.l.b16 %v135
    %v170 = vunpack.c.l.b16 %v136
    %v171 = vunpack.c.l.b16 %v137
    %v172 = vunpack.c.l.b16 %v138
    %v173 = vunpack.c.l.b16 %v139
    %v174 = vunpack.c.l.b16 %v140
    %v175 = vunpack.c.l.b16 %v141
    %v176 = vunpack.c.l.b16 %v142
    %v177 = vunpack.c.l.b16 %v143
    %v178 = vunpack.c.l.b16 %v144
    %v179 = vunpack.c.l.b16 %v145
    %v180 = vunpack.c.l.b16 %v146
    %v181 = vunpack.c.l.b16 %v147
    %v182 = vpack.c.b16 %v167, %v166
    %v183 = vpack.c.b16 %v169, %v168
    %v184 = vpack.c.b16 %v171, %v170
    %v185 = vpack.c.b16 %v173, %v172
    %v186 = vpack.c.b16 %v175, %v174
    %v187 = vpack.c.b16 %v177, %v176
    %v188 = vpack.c.b16 %v179, %v178
    %v189 = vpack.c.b16 %v181, %v180
    %198 = vmatpush.bf16.msra.mxu0 %v189
    %199 = vmatpush.bf16.msra.mxu0 %v188
    %200 = vmatpush.bf16.msra.mxu0 %v187
    %201 = vmatpush.bf16.msra.mxu0 %v186
    %202 = vmatpush.bf16.msra.mxu0 %v185
    %203 = vmatpush.bf16.msra.mxu0 %v184
    %204 = vmatpush.bf16.msra.mxu0 %v183
    %205 = vmatpush.bf16.msra.mxu0 %v182
    %206 = vmatmul.bf16.gmra.mxu0 %v131
    %v207 = vpop.f32.mrf.mxu0
    %v208 = vadd.f32 %v148, %v207
    %v209 = vpop.f32.mrf.mxu0
    %v210 = vadd.f32 %v149, %v209
    %211 = vdwg.mxu0
    %v212 = vmax.f32 %v208, 0.0
    %v213 = vmax.f32 %v210, 0.0
    %v214 = vpack.c.bf16 %v213, %v212
    %v215 = vld [vmem:[#allocation10] sm:$0xf]
    %v216 = vld [vmem:[#allocation10 + $0x4] sm:$0xf]
    %v217 = vld [vmem:[#allocation10 + $0x8] sm:$0xf]
    %v218 = vld [vmem:[#allocation10 + $0xc] sm:$0xf]
    %v219 = vld [vmem:[#allocation10 + $0x10] sm:$0xf]
    %v220 = vld [vmem:[#allocation10 + $0x14] sm:$0xf]
    %v221 = vld [vmem:[#allocation10 + $0x18] sm:$0xf]
    %v222 = vld [vmem:[#allocation10 + $0x1c] sm:$0xf]
    %v223 = vld [vmem:[#allocation10 + $0x20] sm:$0xf]
    %v224 = vld [vmem:[#allocation10 + $0x24] sm:$0xf]
    %v225 = vld [vmem:[#allocation10 + $0x28] sm:$0xf]
    %v226 = vld [vmem:[#allocation10 + $0x2c] sm:$0xf]
    %v227 = vld [vmem:[#allocation10 + $0x30] sm:$0xf]
    %v228 = vld [vmem:[#allocation10 + $0x34] sm:$0xf]
    %v229 = vld [vmem:[#allocation10 + $0x38] sm:$0xf]
    %v230 = vld [vmem:[#allocation10 + $0x3c] sm:$0xf]
    %v231 = vld [vmem:[%s5] sm:$0x1]
    %v233 = vperm.slane %v231, 0
    %v251 = vunpack.c.l.b16 %v215
    %v252 = vunpack.c.l.b16 %v216
    %v253 = vunpack.c.l.b16 %v217
    %v254 = vunpack.c.l.b16 %v218
    %v255 = vunpack.c.l.b16 %v219
    %v256 = vunpack.c.l.b16 %v220
    %v257 = vunpack.c.l.b16 %v221
    %v258 = vunpack.c.l.b16 %v222
    %v259 = vunpack.c.l.b16 %v223
    %v260 = vunpack.c.l.b16 %v224
    %v261 = vunpack.c.l.b16 %v225
    %v262 = vunpack.c.l.b16 %v226
    %v263 = vunpack.c.l.b16 %v227
    %v264 = vunpack.c.l.b16 %v228
    %v265 = vunpack.c.l.b16 %v229
    %v266 = vunpack.c.l.b16 %v230
    %v267 = vpack.c.b16 %v252, %v251
    %v268 = vpack.c.b16 %v254, %v253
    %v269 = vpack.c.b16 %v256, %v255
    %v270 = vpack.c.b16 %v258, %v257
    %v271 = vpack.c.b16 %v260, %v259
    %v272 = vpack.c.b16 %v262, %v261
    %v273 = vpack.c.b16 %v264, %v263
    %v274 = vpack.c.b16 %v266, %v265
    %283 = vmatpush.bf16.msra.mxu0 %v274
    %284 = vmatpush.bf16.msra.mxu0 %v273
    %285 = vmatpush.bf16.msra.mxu0 %v272
    %286 = vmatpush.bf16.msra.mxu0 %v271
    %287 = vmatpush.bf16.msra.mxu0 %v270
    %288 = vmatpush.bf16.msra.mxu0 %v269
    %289 = vmatpush.bf16.msra.mxu0 %v268
    %290 = vmatpush.bf16.msra.mxu0 %v267
    %291 = vmatmul.bf16.gmra.mxu0 %v214
    %v292 = vpop.f32.mrf.mxu0
    %v293 = vadd.f32 %v233, %v292
    %v294 = vpop.f32.mrf.mxu0
    %v295 = vadd.f32 %v233, %v294
    %296 = vdwg.mxu0
    %v297 = vmax.f32 %v293, 0.0
    %v298 = vmax.f32 %v295, 0.0
    %v299 = vpack.c.bf16 %v298, %v297
    %300 = vmatpush.bf16.msra.mxu0 0
    %301 = vmatpush.bf16.msra.mxu0 0
    %302 = vmatpush.bf16.msra.mxu0 0
    %303 = vmatpush.bf16.msra.mxu0 0
    %304 = vmatpush.bf16.msra.mxu0 0
    %305 = vmatpush.bf16.msra.mxu0 0
    %306 = vmatpush.bf16.msra.mxu0 0
    %307 = vmatpush.bf16.msra.mxu0 %v299
    %308 = vmatmul.bf16.gmra.mxu0 %v115
    %v309 = vpop.f32.mrf.mxu0
    %v310 = vadd.f32 0.0, %v309
    %v311 = vpop.f32.mrf.mxu0
    %v312 = vadd.f32 0.0, %v311
    %313 = vdwg.mxu0
    %v314 = vpack.c.bf16 %v312, %v310
    %s315 = scalar_lea.vmem [#allocation8], 64
    %v316 = vld [vmem:[%s315] sm:$0xf]
    %v317 = vld [vmem:[%s315 + $0x4] sm:$0xf]
    %v318 = vld [vmem:[%s315 + $0x8] sm:$0xf]
    %v319 = vld [vmem:[%s315 + $0xc] sm:$0xf]
    %v320 = vld [vmem:[%s315 + $0x10] sm:$0xf]
    %v321 = vld [vmem:[%s315 + $0x14] sm:$0xf]
    %v322 = vld [vmem:[%s315 + $0x18] sm:$0xf]
    %v323 = vld [vmem:[%s315 + $0x1c] sm:$0xf]
    %v324 = vld [vmem:[%s315 + $0x20] sm:$0xf]
    %v325 = vld [vmem:[%s315 + $0x24] sm:$0xf]
    %v326 = vld [vmem:[%s315 + $0x28] sm:$0xf]
    %v327 = vld [vmem:[%s315 + $0x2c] sm:$0xf]
    %v328 = vld [vmem:[%s315 + $0x30] sm:$0xf]
    %v329 = vld [vmem:[%s315 + $0x34] sm:$0xf]
    %v330 = vld [vmem:[%s315 + $0x38] sm:$0xf]
    %v331 = vld [vmem:[%s315 + $0x3c] sm:$0xf]
    %s332 = scalar_lea.vmem [#allocation7], 16
    %v333 = vld [vmem:[%s332] sm:$0xff]
    %v334 = vld [vmem:[%s332 + $0x8] sm:$0xff]
    %v351 = vunpack.c.l.b16 %v316
    %v352 = vunpack.c.l.b16 %v317
    %v353 = vunpack.c.l.b16 %v318
    %v354 = vunpack.c.l.b16 %v319
    %v355 = vunpack.c.l.b16 %v320
    %v356 = vunpack.c.l.b16 %v321
    %v357 = vunpack.c.l.b16 %v322
    %v358 = vunpack.c.l.b16 %v323
    %v359 = vunpack.c.l.b16 %v324
    %v360 = vunpack.c.l.b16 %v325
    %v361 = vunpack.c.l.b16 %v326
    %v362 = vunpack.c.l.b16 %v327
    %v363 = vunpack.c.l.b16 %v328
    %v364 = vunpack.c.l.b16 %v329
    %v365 = vunpack.c.l.b16 %v330
    %v366 = vunpack.c.l.b16 %v331
    %v367 = vpack.c.b16 %v352, %v351
    %v368 = vpack.c.b16 %v354, %v353
    %v369 = vpack.c.b16 %v356, %v355
    %v370 = vpack.c.b16 %v358, %v357
    %v371 = vpack.c.b16 %v360, %v359
    %v372 = vpack.c.b16 %v362, %v361
    %v373 = vpack.c.b16 %v364, %v363
    %v374 = vpack.c.b16 %v366, %v365
    %383 = vmatpush.bf16.msra.mxu0 %v374
    %384 = vmatpush.bf16.msra.mxu0 %v373
    %385 = vmatpush.bf16.msra.mxu0 %v372
    %386 = vmatpush.bf16.msra.mxu0 %v371
    %387 = vmatpush.bf16.msra.mxu0 %v370
    %388 = vmatpush.bf16.msra.mxu0 %v369
    %389 = vmatpush.bf16.msra.mxu0 %v368
    %390 = vmatpush.bf16.msra.mxu0 %v367
    %391 = vmatmul.bf16.gmra.mxu0 %v314
    %v392 = vpop.f32.mrf.mxu0
    %v393 = vadd.f32 %v333, %v392
    %v394 = vpop.f32.mrf.mxu0
    %v395 = vadd.f32 %v334, %v394
    %396 = vdwg.mxu0
    %v397 = vmax.f32 %v393, 0.0
    %v398 = vmax.f32 %v395, 0.0
    %v399 = vpack.c.bf16 %v398, %v397
    %s400 = scalar_lea.vmem [#allocation10], 64
    %v401 = vld [vmem:[%s400] sm:$0xf]
    %v402 = vld [vmem:[%s400 + $0x4] sm:$0xf]
    %v403 = vld [vmem:[%s400 + $0x8] sm:$0xf]
    %v404 = vld [vmem:[%s400 + $0xc] sm:$0xf]
    %v405 = vld [vmem:[%s400 + $0x10] sm:$0xf]
    %v406 = vld [vmem:[%s400 + $0x14] sm:$0xf]
    %v407 = vld [vmem:[%s400 + $0x18] sm:$0xf]
    %v408 = vld [vmem:[%s400 + $0x1c] sm:$0xf]
    %v409 = vld [vmem:[%s400 + $0x20] sm:$0xf]
    %v410 = vld [vmem:[%s400 + $0x24] sm:$0xf]
    %v411 = vld [vmem:[%s400 + $0x28] sm:$0xf]
    %v412 = vld [vmem:[%s400 + $0x2c] sm:$0xf]
    %v413 = vld [vmem:[%s400 + $0x30] sm:$0xf]
    %v414 = vld [vmem:[%s400 + $0x34] sm:$0xf]
    %v415 = vld [vmem:[%s400 + $0x38] sm:$0xf]
    %v416 = vld [vmem:[%s400 + $0x3c] sm:$0xf]
    %s417 = scalar_lea.vmem %s5, 1
    %v418 = vld [vmem:[%s417] sm:$0x1]
    %v420 = vperm.slane %v418, 0
    %v438 = vunpack.c.l.b16 %v401
    %v439 = vunpack.c.l.b16 %v402
    %v440 = vunpack.c.l.b16 %v403
    %v441 = vunpack.c.l.b16 %v404
    %v442 = vunpack.c.l.b16 %v405
    %v443 = vunpack.c.l.b16 %v406
    %v444 = vunpack.c.l.b16 %v407
    %v445 = vunpack.c.l.b16 %v408
    %v446 = vunpack.c.l.b16 %v409
    %v447 = vunpack.c.l.b16 %v410
    %v448 = vunpack.c.l.b16 %v411
    %v449 = vunpack.c.l.b16 %v412
    %v450 = vunpack.c.l.b16 %v413
    %v451 = vunpack.c.l.b16 %v414
    %v452 = vunpack.c.l.b16 %v415
    %v453 = vunpack.c.l.b16 %v416
    %v454 = vpack.c.b16 %v439, %v438
    %v455 = vpack.c.b16 %v441, %v440
    %v456 = vpack.c.b16 %v443, %v442
    %v457 = vpack.c.b16 %v445, %v444
    %v458 = vpack.c.b16 %v447, %v446
    %v459 = vpack.c.b16 %v449, %v448
    %v460 = vpack.c.b16 %v451, %v450
    %v461 = vpack.c.b16 %v453, %v452
    %470 = vmatpush.bf16.msra.mxu0 %v461
    %471 = vmatpush.bf16.msra.mxu0 %v460
    %472 = vmatpush.bf16.msra.mxu0 %v459
    %473 = vmatpush.bf16.msra.mxu0 %v458
    %474 = vmatpush.bf16.msra.mxu0 %v457
    %475 = vmatpush.bf16.msra.mxu0 %v456
    %476 = vmatpush.bf16.msra.mxu0 %v455
    %477 = vmatpush.bf16.msra.mxu0 %v454
    %478 = vmatmul.bf16.gmra.mxu0 %v399
    %v479 = vpop.f32.mrf.mxu0
    %v480 = vadd.f32 %v420, %v479
    %v481 = vpop.f32.mrf.mxu0
    %v482 = vadd.f32 %v420, %v481
    %483 = vdwg.mxu0
    %v484 = vmax.f32 %v480, 0.0
    %v485 = vmax.f32 %v482, 0.0
    %v486 = vpack.c.bf16 %v485, %v484
    %487 = vmatpush.bf16.msra.mxu0 0
    %488 = vmatpush.bf16.msra.mxu0 0
    %489 = vmatpush.bf16.msra.mxu0 0
    %490 = vmatpush.bf16.msra.mxu0 0
    %491 = vmatpush.bf16.msra.mxu0 0
    %492 = vmatpush.bf16.msra.mxu0 0
    %493 = vmatpush.bf16.msra.mxu0 0
    %494 = vmatpush.bf16.msra.mxu0 %v486
    %495 = vmatmul.bf16.gmra.mxu0 %v115
    %v496 = vpop.f32.mrf.mxu0
    %v497 = vadd.f32 0.0, %v496
    %v498 = vpop.f32.mrf.mxu0
    %v499 = vadd.f32 0.0, %v498
    %500 = vdwg.mxu0
    %v501 = vpack.c.bf16 %v499, %v497
    %s502 = scalar_lea.vmem [#allocation8], 128
    %v503 = vld [vmem:[%s502] sm:$0xf]
    %v504 = vld [vmem:[%s502 + $0x4] sm:$0xf]
    %v505 = vld [vmem:[%s502 + $0x8] sm:$0xf]
    %v506 = vld [vmem:[%s502 + $0xc] sm:$0xf]
    %v507 = vld [vmem:[%s502 + $0x10] sm:$0xf]
    %v508 = vld [vmem:[%s502 + $0x14] sm:$0xf]
    %v509 = vld [vmem:[%s502 + $0x18] sm:$0xf]
    %v510 = vld [vmem:[%s502 + $0x1c] sm:$0xf]
    %v511 = vld [vmem:[%s502 + $0x20] sm:$0xf]
    %v512 = vld [vmem:[%s502 + $0x24] sm:$0xf]
    %v513 = vld [vmem:[%s502 + $0x28] sm:$0xf]
    %v514 = vld [vmem:[%s502 + $0x2c] sm:$0xf]
    %v515 = vld [vmem:[%s502 + $0x30] sm:$0xf]
    %v516 = vld [vmem:[%s502 + $0x34] sm:$0xf]
    %v517 = vld [vmem:[%s502 + $0x38] sm:$0xf]
    %v518 = vld [vmem:[%s502 + $0x3c] sm:$0xf]
    %s519 = scalar_lea.vmem [#allocation7], 32
    %v520 = vld [vmem:[%s519] sm:$0xff]
    %v521 = vld [vmem:[%s519 + $0x8] sm:$0xff]
    %v538 = vunpack.c.l.b16 %v503
    %v539 = vunpack.c.l.b16 %v504
    %v540 = vunpack.c.l.b16 %v505
    %v541 = vunpack.c.l.b16 %v506
    %v542 = vunpack.c.l.b16 %v507
    %v543 = vunpack.c.l.b16 %v508
    %v544 = vunpack.c.l.b16 %v509
    %v545 = vunpack.c.l.b16 %v510
    %v546 = vunpack.c.l.b16 %v511
    %v547 = vunpack.c.l.b16 %v512
    %v548 = vunpack.c.l.b16 %v513
    %v549 = vunpack.c.l.b16 %v514
    %v550 = vunpack.c.l.b16 %v515
    %v551 = vunpack.c.l.b16 %v516
    %v552 = vunpack.c.l.b16 %v517
    %v553 = vunpack.c.l.b16 %v518
    %v554 = vpack.c.b16 %v539, %v538
    %v555 = vpack.c.b16 %v541, %v540
    %v556 = vpack.c.b16 %v543, %v542
    %v557 = vpack.c.b16 %v545, %v544
    %v558 = vpack.c.b16 %v547, %v546
    %v559 = vpack.c.b16 %v549, %v548
    %v560 = vpack.c.b16 %v551, %v550
    %v561 = vpack.c.b16 %v553, %v552
    %570 = vmatpush.bf16.msra.mxu0 %v561
    %571 = vmatpush.bf16.msra.mxu0 %v560
    %572 = vmatpush.bf16.msra.mxu0 %v559
    %573 = vmatpush.bf16.msra.mxu0 %v558
    %574 = vmatpush.bf16.msra.mxu0 %v557
    %575 = vmatpush.bf16.msra.mxu0 %v556
    %576 = vmatpush.bf16.msra.mxu0 %v555
    %577 = vmatpush.bf16.msra.mxu0 %v554
    %578 = vmatmul.bf16.gmra.mxu0 %v501
    %v579 = vpop.f32.mrf.mxu0
    %v580 = vadd.f32 %v520, %v579
    %v581 = vpop.f32.mrf.mxu0
    %v582 = vadd.f32 %v521, %v581
    %583 = vdwg.mxu0
    %v584 = vmax.f32 %v580, 0.0
    %v585 = vmax.f32 %v582, 0.0
    %v586 = vpack.c.bf16 %v585, %v584
    %s587 = scalar_lea.vmem [#allocation10], 128
    %v588 = vld [vmem:[%s587] sm:$0xf]
    %v589 = vld [vmem:[%s587 + $0x4] sm:$0xf]
    %v590 = vld [vmem:[%s587 + $0x8] sm:$0xf]
    %v591 = vld [vmem:[%s587 + $0xc] sm:$0xf]
    %v592 = vld [vmem:[%s587 + $0x10] sm:$0xf]
    %v593 = vld [vmem:[%s587 + $0x14] sm:$0xf]
    %v594 = vld [vmem:[%s587 + $0x18] sm:$0xf]
    %v595 = vld [vmem:[%s587 + $0x1c] sm:$0xf]
    %v596 = vld [vmem:[%s587 + $0x20] sm:$0xf]
    %v597 = vld [vmem:[%s587 + $0x24] sm:$0xf]
    %v598 = vld [vmem:[%s587 + $0x28] sm:$0xf]
    %v599 = vld [vmem:[%s587 + $0x2c] sm:$0xf]
    %v600 = vld [vmem:[%s587 + $0x30] sm:$0xf]
    %v601 = vld [vmem:[%s587 + $0x34] sm:$0xf]
    %v602 = vld [vmem:[%s587 + $0x38] sm:$0xf]
    %v603 = vld [vmem:[%s587 + $0x3c] sm:$0xf]
    %s604 = scalar_lea.vmem %s5, 2
    %v605 = vld [vmem:[%s604] sm:$0x1]
    %v607 = vperm.slane %v605, 0
    %v625 = vunpack.c.l.b16 %v588
    %v626 = vunpack.c.l.b16 %v589
    %v627 = vunpack.c.l.b16 %v590
    %v628 = vunpack.c.l.b16 %v591
    %v629 = vunpack.c.l.b16 %v592
    %v630 = vunpack.c.l.b16 %v593
    %v631 = vunpack.c.l.b16 %v594
    %v632 = vunpack.c.l.b16 %v595
    %v633 = vunpack.c.l.b16 %v596
    %v634 = vunpack.c.l.b16 %v597
    %v635 = vunpack.c.l.b16 %v598
    %v636 = vunpack.c.l.b16 %v599
    %v637 = vunpack.c.l.b16 %v600
    %v638 = vunpack.c.l.b16 %v601
    %v639 = vunpack.c.l.b16 %v602
    %v640 = vunpack.c.l.b16 %v603
    %v641 = vpack.c.b16 %v626, %v625
    %v642 = vpack.c.b16 %v628, %v627
    %v643 = vpack.c.b16 %v630, %v629
    %v644 = vpack.c.b16 %v632, %v631
    %v645 = vpack.c.b16 %v634, %v633
    %v646 = vpack.c.b16 %v636, %v635
    %v647 = vpack.c.b16 %v638, %v637
    %v648 = vpack.c.b16 %v640, %v639
    %657 = vmatpush.bf16.msra.mxu0 %v648
    %658 = vmatpush.bf16.msra.mxu0 %v647
    %659 = vmatpush.bf16.msra.mxu0 %v646
    %660 = vmatpush.bf16.msra.mxu0 %v645
    %661 = vmatpush.bf16.msra.mxu0 %v644
    %662 = vmatpush.bf16.msra.mxu0 %v643
    %663 = vmatpush.bf16.msra.mxu0 %v642
    %664 = vmatpush.bf16.msra.mxu0 %v641
    %665 = vmatmul.bf16.gmra.mxu0 %v586
    %v666 = vpop.f32.mrf.mxu0
    %v667 = vadd.f32 %v607, %v666
    %v668 = vpop.f32.mrf.mxu0
    %v669 = vadd.f32 %v607, %v668
    %670 = vdwg.mxu0
    %671 = vst [vmem:[#allocation11] sm:$0xff] %v667
    %672 = vst [vmem:[#allocation11 + $0x8] sm:$0xff] %v669
    // Predicated region
    $region46: #{tpu_custom_call.1} parent=1 // pred_check
      _
    $region47: #{tpu_custom_call.1} parent=1 // pred_check_branch
      %674 = sbr.rel (0) target = $region49
    $region48: #{tpu_custom_call.1} parent=1 // pred_region
      %676 = vsyncadd [#allocation4], 0
      %s677 = sshll.u32 [#allocation11], 4
      %s678 = int_to_ptr.vmem [resolvable:$true] %s677
      %s679 = sshll.u32 %s6, 4
      %s680 = int_to_ptr.hbm [resolvable:$true] %s679
      %685 = dma.vmem_to_hbm [thread:$0]  %s678, 256, %s680, [#allocation4], 128, 128, 8
    $region49: #{tpu_custom_call.1} parent=1 // pred_fallthru
      _
    // Predicated region
    $region50: #{tpu_custom_call.1} parent=1 // pred_check
      _
    $region51: #{tpu_custom_call.1} parent=1 // pred_check_branch
      %687 = sbr.rel (0) target = $region53
    $region52: #{tpu_custom_call.1} parent=1 // pred_region
      %689 = dma.done [#allocation4], 256
    $region53: #{tpu_custom_call.1} parent=1 // pred_fallthru
      _
    %690 = vsyncpa [#allocation3], 1
    %691 = vsyncpa [#allocation6], 1
    %692 = vsyncpa [#allocation9], 1
    %693 = vsyncpa [#allocation4], 1

</llo_original>
